<compile_context>
chip_gen: v6e
topology: v6e:2x2x1
jax: 0.10.0
libtpu: 0.0.40
codegen_flags: <defaults>
</compile_context>

<pallas_src>
import functools

import jax
import jax.numpy as jnp
from jax.experimental import pallas as pl
from jax.experimental.pallas import tpu as pltpu

EPS = 1e-4  # matches torch.tensor(0.0001)

_VMEM_BUDGET = 40 * 1024 * 1024   # conservative tile budget (fits v7x's 64 MiB)
_VMEM_LIMIT = 48 * 1024 * 1024    # scoped VMEM limit passed to the compiler
_K_SPLIT_MIN_DIN = 2048           # only split K for genuinely wide inputs


def _round_up(n: int, m: int) -> int:
    return ((n + m - 1) // m) * m


def _fp_linear_kernel(x_ref, w_ref, b_ref, o_ref, *, cast_to_bf16):
    """Single-K path: o = max(x @ W + b, eps) for one batch tile."""
    x = x_ref[...]
    w = w_ref[...]
    if cast_to_bf16:
        x = x.astype(jnp.bfloat16)
        w = w.astype(jnp.bfloat16)
    acc = jnp.dot(x, w, preferred_element_type=jnp.float32)
    acc = acc + b_ref[...].astype(jnp.float32)
    # ForcePositive: torch.max(o, eps) fused on the VPU, in f32, before store.
    o_ref[...] = jnp.maximum(acc, jnp.float32(EPS)).astype(o_ref.dtype)


def _fp_linear_ksplit_kernel(x_ref, w_ref, b_ref, o_ref, acc_ref, *, cast_to_bf16):
    """K-split path (large Din): accumulate over the 'arbitrary' K axis."""
    k = pl.program_id(1)

    @pl.when(k == 0)
    def _():
        acc_ref[...] = jnp.zeros_like(acc_ref)

    x = x_ref[...]
    w = w_ref[...]
    if cast_to_bf16:
        x = x.astype(jnp.bfloat16)
        w = w.astype(jnp.bfloat16)
    acc_ref[...] += jnp.dot(x, w, preferred_element_type=jnp.float32)

    @pl.when(k == pl.num_programs(1) - 1)
    def _():
        acc = acc_ref[...] + b_ref[...].astype(jnp.float32)
        o_ref[...] = jnp.maximum(acc, jnp.float32(EPS)).astype(o_ref.dtype)


def force_positive_linear(x, w, b, *, tm: int = 1024, tk: int = 512,
                          cast_to_bf16: bool = False, out_dtype=jnp.float32):
    """o = max(x @ w + b, eps).  x:(B,Din)  w:(Din,Dout)  b:(1,Dout) -> (B,Dout)."""
    B, Din = x.shape
    Dout = w.shape[1]

    x_item = jnp.dtype(x.dtype).itemsize
    w_item = jnp.dtype(w.dtype).itemsize
    out_item = jnp.dtype(out_dtype).itemsize

    # Sublane granularity of the batch-tile dim (8 for f32, 16 for bf16 inputs).
    sub = 16 if jnp.dtype(x.dtype) == jnp.bfloat16 else 8

    # --- K tiling: only split when Din is genuinely wide and cleanly tileable.
    use_ksplit = (Din >= _K_SPLIT_MIN_DIN) and (Din % 128 == 0)
    tk_eff = Din
    if use_ksplit:
        tk_eff = max(128, (min(tk, Din) // 128) * 128)
        while Din % tk_eff != 0:
            tk_eff -= 128
    num_k = Din // tk_eff if use_ksplit else 1

    # --- Batch tiling.
    tm_eff = min(_round_up(tm, sub), _round_up(B, sub))
    # Feed both TensorCores on v7x: aim for >= 2 parallel batch tiles.
    if pl.cdiv(B, tm_eff) < 2 and B > sub:
        tm_eff = max(sub, _round_up(pl.cdiv(B, 2), sub))

    # Shrink the batch tile until the double-buffered working set fits VMEM.
    def _vmem_estimate(tm_e):
        est = 2 * tm_e * tk_eff * x_item                 # x tiles (double-buffered)
        est += 2 * tk_eff * Dout * w_item                # W tile(s)
        est += 2 * tm_e * Dout * out_item                # out tiles
        est += 2 * Dout * jnp.dtype(b.dtype).itemsize    # bias
        if use_ksplit:
            est += tm_e * Dout * 4                       # f32 accumulator scratch
        return est

    while _vmem_estimate(tm_eff) > _VMEM_BUDGET and tm_eff > sub:
        tm_eff = max(sub, _round_up(tm_eff // 2, sub))

    num_m = pl.cdiv(B, tm_eff)

    cost = pl.CostEstimate(
        flops=2 * B * Din * Dout,
        transcendentals=0,
        bytes_accessed=(B * Din * x_item + Din * Dout * w_item
                        + Dout * jnp.dtype(b.dtype).itemsize + B * Dout * out_item),
    )

    if not use_ksplit:
        kernel = functools.partial(_fp_linear_kernel, cast_to_bf16=cast_to_bf16)
        grid = (num_m,)
        in_specs = [
            pl.BlockSpec((tm_eff, Din), lambda i: (i, 0)),   # batch tile of x
            pl.BlockSpec((Din, Dout), lambda i: (0, 0)),     # W resident in VMEM
            pl.BlockSpec((1, Dout), lambda i: (0, 0)),       # bias resident
        ]
        out_specs = pl.BlockSpec((tm_eff, Dout), lambda i: (i, 0))
        scratch_shapes = ()
        dim_sem = ("parallel",)
    else:
        kernel = functools.partial(_fp_linear_ksplit_kernel, cast_to_bf16=cast_to_bf16)
        grid = (num_m, num_k)
        in_specs = [
            pl.BlockSpec((tm_eff, tk_eff), lambda i, k: (i, k)),
            pl.BlockSpec((tk_eff, Dout), lambda i, k: (k, 0)),
            pl.BlockSpec((1, Dout), lambda i, k: (0, 0)),
        ]
        out_specs = pl.BlockSpec((tm_eff, Dout), lambda i, k: (i, 0))
        scratch_shapes = (pltpu.VMEM((tm_eff, Dout), jnp.float32),)
        dim_sem = ("parallel", "arbitrary")

    return pl.pallas_call(
        kernel,
        out_shape=jax.ShapeDtypeStruct((B, Dout), out_dtype),
        grid=grid,
        in_specs=in_specs,
        out_specs=out_specs,
        scratch_shapes=scratch_shapes,
        compiler_params=pltpu.CompilerParams(
            dimension_semantics=dim_sem,
            vmem_limit_bytes=_VMEM_LIMIT,
        ),
        cost_estimate=cost,
    )(x, w, b)


if __name__ == "__main__":
    key = jax.random.PRNGKey(0)
    kx, kw, kb = jax.random.split(key, 3)

    # Small shapes consistent with an MLP ratio-estimator head.
    batch, d_in, d_out = 8, 32, 16

    x = jax.random.normal(kx, (batch, d_in), dtype=jnp.float32)
    w = jax.random.normal(kw, (d_in, d_out), dtype=jnp.float32) * 0.1
    b = jax.random.normal(kb, (1, d_out), dtype=jnp.float32) * 0.1

    # Default path: exact f32 (matches the PyTorch module semantics).
    out = force_positive_linear(x, w, b)
    out = jax.block_until_ready(out)

    # Plain-JAX reference of ForcePositive(Linear) forward.
    ref = jnp.maximum(x @ w + b, EPS)

    assert out.shape == (batch, d_out)
    assert bool(jnp.all(out >= EPS))
    assert bool(jnp.allclose(out, ref, atol=2e-2, rtol=2e-2))

    print("KERNEL_OK")
</pallas_src>

<mosaic_0001>
module attributes {stable_mosaic.version = 11 : i64} {
  func.func @_fp_linear_kernel(%arg0: i32, %arg1: memref<8x32xf32, #tpu.memory_space<vmem>>, %arg2: memref<32x16xf32, #tpu.memory_space<vmem>>, %arg3: memref<1x16xf32, #tpu.memory_space<vmem>>, %arg4: memref<8x16xf32, #tpu.memory_space<vmem>>) attributes {dimension_semantics = [#tpu.dimension_semantics<parallel>], iteration_bounds = array<i64: 1>, scalar_prefetch = 0 : i64, scratch_operands = 0 : i64, tpu.core_type = #tpu.core_type<tc>, window_params = [{transform_indices = @transform_0, window_bounds = array<i64: 8, 32>}, {pipeline_mode = #tpu.pipeline_mode<synchronous>, transform_indices = @transform_1, window_bounds = array<i64: 32, 16>}, {pipeline_mode = #tpu.pipeline_mode<synchronous>, transform_indices = @transform_2, window_bounds = array<i64: 1, 16>}, {transform_indices = @transform_3, window_bounds = array<i64: 8, 16>}]} {
    %c0 = arith.constant 0 : index
    %c0_0 = arith.constant 0 : index
    %0 = vector.load %arg1[%c0, %c0_0] : memref<8x32xf32, #tpu.memory_space<vmem>>, vector<8x32xf32>
    %c0_1 = arith.constant 0 : index
    %c0_2 = arith.constant 0 : index
    %1 = vector.load %arg2[%c0_1, %c0_2] : memref<32x16xf32, #tpu.memory_space<vmem>>, vector<32x16xf32>
    %cst = arith.constant dense<0.000000e+00> : vector<8x16xf32>
    %2 = tpu.matmul %0, %1, %cst {dimension_numbers = #tpu.dot_dimension_numbers<[1], [0], [0], [1], [0, 0, 1, 1], [], []>} : vector<8x32xf32>, vector<32x16xf32>, vector<8x16xf32> -> vector<8x16xf32>
    %c0_3 = arith.constant 0 : index
    %c0_4 = arith.constant 0 : index
    %3 = vector.load %arg3[%c0_3, %c0_4] : memref<1x16xf32, #tpu.memory_space<vmem>>, vector<1x16xf32>
    %4 = vector.broadcast %3 : vector<1x16xf32> to vector<8x16xf32>
    %5 = arith.addf %2, %4 : vector<8x16xf32>
    %cst_5 = arith.constant 9.99999974E-5 : f32
    %6 = vector.broadcast %cst_5 : f32 to vector<8x16xf32>
    %7 = arith.maximumf %5, %6 : vector<8x16xf32>
    %c0_6 = arith.constant 0 : index
    %c0_7 = arith.constant 0 : index
    %8 = vector.load %arg4[%c0_6, %c0_7] : memref<8x16xf32, #tpu.memory_space<vmem>>, vector<8x16xf32>
    tpu.vector_store %arg4[%c0_6, %c0_7], %7 {strides = array<i32>} : memref<8x16xf32, #tpu.memory_space<vmem>>, vector<8x16xf32>,
    return
  }
  func.func @transform_0(%arg0: i32) -> (i32, i32) {
    %c0_i32 = arith.constant 0 : i32
    %c0_i32_0 = arith.constant 0 : i32
    return %arg0, %c0_i32 : i32, i32
  }
  func.func @transform_1(%arg0: i32) -> (i32, i32) {
    %c0_i32 = arith.constant 0 : i32
    %c0_i32_0 = arith.constant 0 : i32
    %c0_i32_1 = arith.constant 0 : i32
    return %c0_i32, %c0_i32_0 : i32, i32
  }
  func.func @transform_2(%arg0: i32) -> (i32, i32) {
    %c0_i32 = arith.constant 0 : i32
    %c0_i32_0 = arith.constant 0 : i32
    %c0_i32_1 = arith.constant 0 : i32
    return %c0_i32, %c0_i32_0 : i32, i32
  }
  func.func @transform_3(%arg0: i32) -> (i32, i32) {
    %c0_i32 = arith.constant 0 : i32
    %c0_i32_0 = arith.constant 0 : i32
    return %arg0, %c0_i32 : i32, i32
  }
}

</mosaic_0001>

<llo_original>
// kernel: tpu_custom_call.1
$region0: #{tpu_custom_call.1}
  #allocation0 [shape = 'u32[]', space=smem, size = 0x4, offset = 0x4, fixed_abs, tag = 'smem constant byte address 0x4 - core index']
  #allocation1 [shape = 'u32[144,128]{1,0:T(1,128)}', space=vmem, size = 0x12000, scoped, tag = 'internal scratch']
  %s0 = inlined_call_operand.vmem [shape: f32[8,32], index: 0, kind: input, shape index: {}]
  %s1 = inlined_call_operand.vmem [shape: f32[32,16], index: 1, kind: input, shape index: {}]
  %s2 = inlined_call_operand.vmem [shape: f32[1,16], index: 2, kind: input, shape index: {}]
  %s3 = inlined_call_operand.hbm [shape: f32[8,16], index: 3, kind: output, shape index: {}]
  %s4 = sld [smem:[#allocation0]]
  $region22: #{tpu_custom_call.1} parent=0
    _
  %s6 = ssub.s32 1, %s4
  %s7 = scalar_select 0, %s6, %s4
  $region1: #{tpu_custom_call.1} parent=0
    #allocation2 [shape = 'u8[4096]{0}', space=vmem, size = 0x1000, scoped, tag = 'output window, operand 0, single buffered']
    #allocation3 [shape = 's32[1]{0}', space=sflag, size = 0x4, scoped, tag = 'scoped memory for tpu_custom_call.1']
    %8 = vsyncpa [#allocation3], 0
    // Predicated region
    $region2: #{tpu_custom_call.1} parent=1 // pred_check
      _
    $region3: #{tpu_custom_call.1} parent=1 // pred_check_branch
      %10 = sbr.rel (0) target = $region5
    $region4: #{tpu_custom_call.1} parent=1 // pred_region
      _
    $region5: #{tpu_custom_call.1} parent=1 // pred_fallthru
      _
    // Predicated region
    $region6: #{tpu_custom_call.1} parent=1 // pred_check
      _
    $region7: #{tpu_custom_call.1} parent=1 // pred_check_branch
      %12 = sbr.rel (0) target = $region9
    $region8: #{tpu_custom_call.1} parent=1 // pred_region
      _
    $region9: #{tpu_custom_call.1} parent=1 // pred_fallthru
      _
    // Predicated region
    $region10: #{tpu_custom_call.1} parent=1 // pred_check
      _
    $region11: #{tpu_custom_call.1} parent=1 // pred_check_branch
      %14 = sbr.rel (0) target = $region13
    $region12: #{tpu_custom_call.1} parent=1 // pred_region
      _
    $region13: #{tpu_custom_call.1} parent=1 // pred_fallthru
      _
    %v15 = vld [vmem:[%s0] sm:$0xff]
    %v16 = vld [vmem:[%s1] sm:$0xff]
    %v17 = vld [vmem:[%s1 + $0x8] sm:$0xff]
    %v18 = vld [vmem:[%s1 + $0x10] sm:$0xff]
    %v19 = vld [vmem:[%s1 + $0x18] sm:$0xff]
    %v20 = vld [vmem:[%s2] sm:$0x1]
    %v22 = vlaneseq
    %v23 = vshrl.u32 %v22, 7
    %v24 = vsub.s32 0, %v23
    %v25 = vrot.slane %v20, %v24
    %vm27 = vcmask 261120
    %v29 = vsel %vm27, %v15, 0
    %31 = vmatprep.subr.mxu0 0.0
    %32 = vmatpush1.msra.mxu0 0.0
    %33 = vmatprep.subr.mxu0 0.0
    %34 = vmatpush1.msra.mxu0 0.0
    %35 = vmatprep.subr.mxu0 0.0
    %36 = vmatpush1.msra.mxu0 0.0
    %37 = vmatprep.subr.mxu0 0.0
    %38 = vmatpush1.msra.mxu0 0.0
    %39 = vmatprep.subr.mxu0 0.0
    %40 = vmatpush1.msra.mxu0 0.0
    %41 = vmatprep.subr.mxu0 0.0
    %42 = vmatpush1.msra.mxu0 0.0
    %43 = vmatprep.subr.mxu0 0.0
    %44 = vmatpush1.msra.mxu0 0.0
    %45 = vmatprep.subr.mxu0 0.0
    %46 = vmatpush1.msra.mxu0 0.0
    %47 = vmatprep.subr.mxu0 0.0
    %48 = vmatpush1.msra.mxu0 0.0
    %49 = vmatprep.subr.mxu0 0.0
    %50 = vmatpush1.msra.mxu0 0.0
    %51 = vmatprep.subr.mxu0 0.0
    %52 = vmatpush1.msra.mxu0 0.0
    %53 = vmatprep.subr.mxu0 0.0
    %54 = vmatpush1.msra.mxu0 0.0
    %55 = vmatprep.subr.mxu0 0.0
    %56 = vmatpush1.msra.mxu0 %v19
    %57 = vmatprep.subr.mxu0 0.0
    %58 = vmatpush1.msra.mxu0 %v18
    %59 = vmatprep.subr.mxu0 0.0
    %60 = vmatpush1.msra.mxu0 %v17
    %61 = vmatprep.subr.mxu0 0.0
    %62 = vmatpush1.msra.mxu0 %v16
    %63 = vmatprep.subr.mxu0 0.0
    %64 = vmatpush2.msra.mxu0 0.0
    %65 = vmatprep.subr.mxu0 0.0
    %66 = vmatpush2.msra.mxu0 0.0
    %67 = vmatprep.subr.mxu0 0.0
    %68 = vmatpush2.msra.mxu0 0.0
    %69 = vmatprep.subr.mxu0 0.0
    %70 = vmatpush2.msra.mxu0 0.0
    %71 = vmatprep.subr.mxu0 0.0
    %72 = vmatpush2.msra.mxu0 0.0
    %73 = vmatprep.subr.mxu0 0.0
    %74 = vmatpush2.msra.mxu0 0.0
    %75 = vmatprep.subr.mxu0 0.0
    %76 = vmatpush2.msra.mxu0 0.0
    %77 = vmatprep.subr.mxu0 0.0
    %78 = vmatpush2.msra.mxu0 0.0
    %79 = vmatprep.subr.mxu0 0.0
    %80 = vmatpush2.msra.mxu0 0.0
    %81 = vmatprep.subr.mxu0 0.0
    %82 = vmatpush2.msra.mxu0 0.0
    %83 = vmatprep.subr.mxu0 0.0
    %84 = vmatpush2.msra.mxu0 0.0
    %85 = vmatprep.subr.mxu0 0.0
    %86 = vmatpush2.msra.mxu0 0.0
    %87 = vmatprep.subr.mxu0 0.0
    %88 = vmatpush2.msra.mxu0 0.0
    %89 = vmatprep.subr.mxu0 0.0
    %90 = vmatpush2.msra.mxu0 0.0
    %91 = vmatprep.subr.mxu0 0.0
    %92 = vmatpush2.msra.mxu0 0.0
    %93 = vmatprep.subr.mxu0 0.0
    %94 = vmatpush2.msra.mxu0 0.0
    %95 = vmatprep.mubr.f32.mxu0 0.0
    %96 = vmatmul.mubr.f32.gmra.mxu0 %v29
    %v97 = vpop.f32.mrf.mxu0
    %v98 = vadd.f32 %v25, %v97
    %v99 = vpop.f32.mrf.mxu0
    %100 = vdwg.mxu0
    %v101 = vmax.f32 %v98, 0.0001
    %vm102 = vcmask 130048
    %103 = vst.msk [vmem:[#allocation2] sm:$0xff] %vm102, %v101
    // Predicated region
    $region14: #{tpu_custom_call.1} parent=1 // pred_check
      _
    $region15: #{tpu_custom_call.1} parent=1 // pred_check_branch
      %105 = sbr.rel (0) target = $region17
    $region16: #{tpu_custom_call.1} parent=1 // pred_region
      %s107 = ssub.s32 128, 128
      %108 = vsyncadd [#allocation3], %s107
      %s110 = sshll.u32 [#allocation2], 4
      %s111 = int_to_ptr.vmem [resolvable:$true] %s110
      %113 = dma.vmem_to_hbm [thread:$0]  %s111, 128, %s3, [#allocation3]
    $region17: #{tpu_custom_call.1} parent=1 // pred_fallthru
      _
    // Predicated region
    $region18: #{tpu_custom_call.1} parent=1 // pred_check
      _
    $region19: #{tpu_custom_call.1} parent=1 // pred_check_branch
      %115 = sbr.rel (0) target = $region21
    $region20: #{tpu_custom_call.1} parent=1 // pred_region
      %116 = dma.done [#allocation3], 128
    $region21: #{tpu_custom_call.1} parent=1 // pred_fallthru
      _
    %117 = vsyncpa [#allocation3], 1

</llo_original>
